<compile_context>
chip_gen: v6e
topology: v6e:2x2x1
jax: 0.10.0
libtpu: 0.0.40
codegen_flags: <defaults>
</compile_context>

<pallas_src>
import functools

import jax
import jax.numpy as jnp
from jax.experimental import pallas as pl
from jax.experimental.pallas import tpu as pltpu


def _ral(n, m=16):
    """Round up to a multiple of m (16 = bf16 sublane-packing tile)."""
    return ((n + m - 1) // m) * m


def _row_offsets(n_input, H):
    """Static row offsets of each block inside the packed (rows, 16H) weight+bias slab."""
    o_w1 = 0                              # linear1 weight            (n_input, H)
    o_i0 = o_w1 + _ral(n_input)           # layer-0 Wih (interleaved) (H, 8H)
    o_i1 = o_i0 + _ral(H)                 # layer-1 Wih (interleaved) (2H, 8H)
    o_hh = o_i1 + _ral(2 * H)             # both layers' Whh block    (4H, 16H)
    o_w2 = o_hh + _ral(4 * H)             # linear2 weight            (2H, n_output)
    o_b = o_w2 + _ral(2 * H)              # bias rows                 (8, 16H)
    n_rows = o_b + 8
    return o_w1, o_i0, o_i1, o_hh, o_w2, o_b, n_rows


# ---------------------------------------------------------------------------
# fused kernel
# ---------------------------------------------------------------------------
def _make_rnn_kernel(n_input, H):
    o_w1, o_i0, o_i1, o_hh, o_w2, o_b, _ = _row_offsets(n_input, H)
    G = 2 * H                       # per-gate lane width covering [fw | bw]
    H4, H6, H8, H16 = 4 * H, 6 * H, 8 * H, 16 * H
    f32, bf16 = jnp.float32, jnp.bfloat16

    def kernel(wb_ref, x_ref, s_ref, y_ref, s_out_ref):
        # ---- single load of the packed f32 state: [h0(2H) h1(2H) | c0(2H) c1(2H)] ----
        s = s_ref[...]
        h_all = s[:, 0:H4].astype(bf16)            # (B, 4H) = [h0_f h0_b h1_f h1_b]
        c0 = s[:, H4:H6]                           # (B, 2H)
        c1 = s[:, H6:H8]                           # (B, 2H)

        # ---- recurrent contributions of BOTH layers, hoisted off the serial chain ----
        # one (B,4H) x (4H,16H) matmul: cols 0:8H = layer-0 gates, cols 8H:16H = layer-1 gates
        w_hh = wb_ref[o_hh:o_hh + H4, :]
        h_part = jnp.dot(h_all, w_hh, preferred_element_type=f32)     # (B, 16H)
        hp0 = h_part[:, 0:H8]
        hp1 = h_part[:, H8:H16]

        # ---- biases (single slab rows, cast up to f32) ----
        b1 = wb_ref[o_b:o_b + 1, 0:H].astype(f32)          # (1, H)
        bg = wb_ref[o_b + 1:o_b + 2, :].astype(f32)        # (1, 16H) packed gate biases
        b2 = wb_ref[o_b + 2:o_b + 3, 0:H8].astype(f32)     # (1, 8H), zero beyond n_output

        def cell(gates, c_prev):
            # gate lanes (fw/bw interleaved per gate): [i(2H) | f(2H) | o(2H) | g(2H)]
            sig = jax.nn.sigmoid(gates)                    # full-vreg sigmoid
            tnh = jnp.tanh(gates[:, 2 * G:])               # vreg-aligned tanh over [o | g]
            i = sig[:, 0:G]
            f = sig[:, G:2 * G]
            o = sig[:, 2 * G:3 * G]
            g = tnh[:, G:2 * G]
            c_new = f * c_prev + i * g                     # (B, 2H) = [fw | bw]
            h_new = o * jnp.tanh(c_new)                    # (B, 2H) = [fw | bw]
            return h_new, c_new

        # ---- critical chain: linear1 -> L0 (x-part) -> L1 (x-part) -> linear2 ----
        # TODO(synk): nn.Dropout is identity at inference (eval) time; training-mode
        # dropout masks are not generated here.
        x = x_ref[...].astype(bf16)
        w1 = wb_ref[o_w1:o_w1 + n_input, 0:H]
        x1 = jnp.maximum(jnp.dot(x, w1, preferred_element_type=f32) + b1, 0.0)   # (B, H)

        # LSTM layer 0 (seq len 1: fwd & bwd both see the single step)
        w_i0 = wb_ref[o_i0:o_i0 + H, 0:H8]
        g0 = jnp.dot(x1.astype(bf16), w_i0, preferred_element_type=f32) + hp0 + bg[:, 0:H8]
        h0n, c0n = cell(g0, c0)
        # early writeback of layer-0 state; these lanes are never read again
        # (the only state read happened at kernel entry), so this is safe even if the
        # aliased s_ref/s_out_ref share a buffer, and it overlaps with layer 1 + linear2.
        s_out_ref[:, 0:G] = h0n
        s_out_ref[:, H4:H6] = c0n

        # LSTM layer 1
        w_i1 = wb_ref[o_i1:o_i1 + 2 * H, 0:H8]
        g1 = jnp.dot(h0n.astype(bf16), w_i1, preferred_element_type=f32) + hp1 + bg[:, H8:H16]
        h1n, c1n = cell(g1, c1)
        s_out_ref[:, G:H4] = h1n
        s_out_ref[:, H6:H8] = c1n

        # linear2 (lane-dense padded output; wrapper/consumer slices to n_output)
        w2 = wb_ref[o_w2:o_w2 + 2 * H, 0:H8]
        y_ref[...] = jnp.dot(h1n.astype(bf16), w2, preferred_element_type=f32) + b2

    return kernel


# ---------------------------------------------------------------------------
# parameter construction & packing
# ---------------------------------------------------------------------------
def init_params(key, n_input, n_output, n_hidden):
    """Deterministic synthetic parameters in PyTorch layout, pre-transposed to (in, out)."""
    H = n_hidden
    ks = jax.random.split(key, 32)
    it = iter(ks)
    s = 0.1

    def rnd(shape):
        return (s * jax.random.normal(next(it), shape)).astype(jnp.float32)

    p = {}
    p["w1"] = rnd((H, n_input)).T                          # (n_input, H)
    p["b1"] = rnd((1, H))
    for layer, d_in in ((0, H), (1, 2 * H)):
        for tag in ("f", "b"):
            p[f"wih{layer}{tag}"] = rnd((4 * H, d_in)).T   # (d_in, 4H), gates [i f g o]
            p[f"whh{layer}{tag}"] = rnd((4 * H, H)).T      # (H, 4H)
            p[f"bias{layer}{tag}"] = rnd((1, 4 * H)) + rnd((1, 4 * H))   # b_ih + b_hh
    p["w2"] = rnd((n_output, 2 * H)).T                     # (2H, n_output)
    p["b2"] = rnd((1, n_output))
    return p


def quantize_bf16(params):
    """Round every parameter to bf16 (and back to f32) - the values the kernel slab holds."""
    return {k: v.astype(jnp.bfloat16).astype(jnp.float32) for k, v in params.items()}


def _gate_blocks(w, H):
    # PyTorch column order [i f g o] -> target order [i f o g]
    return [w[:, 0:H], w[:, H:2 * H], w[:, 3 * H:4 * H], w[:, 2 * H:3 * H]]


def _interleave(fw_blocks, bw_blocks):
    cols = []
    for fw, bw in zip(fw_blocks, bw_blocks):
        cols.append(fw)
        cols.append(bw)
    return jnp.concatenate(cols, axis=1)                   # (rows, 8H)


def _pad_to(a, rows, cols):
    return jnp.pad(a, ((0, rows - a.shape[0]), (0, cols - a.shape[1])))


def pack_params(params, n_input, n_output, n_hidden):
    """Pack all weights AND biases into one bf16 (rows, 16H) slab (single input DMA)."""
    H = n_hidden
    H8, H16 = 8 * H, 16 * H
    assert n_output <= H8
    o_w1, o_i0, o_i1, o_hh, o_w2, o_b, n_rows = _row_offsets(n_input, H)
    zH = jnp.zeros((H, H), jnp.float32)

    def gb(name):
        return _gate_blocks(params[name], H)

    # input weights, gate columns interleaved [i_f i_b | f_f f_b | o_f o_b | g_f g_b]
    w_i0 = _interleave(gb("wih0f"), gb("wih0b"))           # (H,  8H)
    w_i1 = _interleave(gb("wih1f"), gb("wih1b"))           # (2H, 8H)

    # recurrent weights for both layers in one (4H, 16H) block:
    #   rows 0:2H  (h0 = [h0_f ; h0_b]) -> layer-0 gate columns 0:8H
    #   rows 2H:4H (h1 = [h1_f ; h1_b]) -> layer-1 gate columns 8H:16H
    whh0 = jnp.concatenate([_interleave(gb("whh0f"), [zH] * 4),
                            _interleave([zH] * 4, gb("whh0b"))], axis=0)   # (2H, 8H)
    whh1 = jnp.concatenate([_interleave(gb("whh1f"), [zH] * 4),
                            _interleave([zH] * 4, gb("whh1b"))], axis=0)   # (2H, 8H)
    z2 = jnp.zeros((2 * H, H8), jnp.float32)
    w_hh = jnp.concatenate([jnp.concatenate([whh0, z2], axis=1),
                            jnp.concatenate([z2, whh1], axis=1)], axis=0)  # (4H, 16H)

    # bias rows: row0 = b1, row1 = [layer-0 gate bias | layer-1 gate bias], row2 = b2
    bg0 = _interleave(gb("bias0f"), gb("bias0b"))          # (1, 8H)
    bg1 = _interleave(gb("bias1f"), gb("bias1b"))          # (1, 8H)
    bias_rows = jnp.concatenate([
        _pad_to(params["b1"], 1, H16),
        jnp.concatenate([bg0, bg1], axis=1),
        _pad_to(params["b2"], 1, H16),
        jnp.zeros((5, H16), jnp.float32),
    ], axis=0)                                             # (8, 16H)

    slab = jnp.concatenate([
        _pad_to(params["w1"], o_i0 - o_w1, H16),
        _pad_to(w_i0, o_i1 - o_i0, H16),
        _pad_to(w_i1, o_hh - o_i1, H16),
        _pad_to(w_hh, o_w2 - o_hh, H16),
        _pad_to(params["w2"], o_b - o_w2, H16),
        bias_rows,
    ], axis=0)
    assert slab.shape == (n_rows, H16)
    return slab.astype(jnp.bfloat16)


# ---------------------------------------------------------------------------
# packed-state helpers (used only at sequence boundaries / verification)
# ---------------------------------------------------------------------------
def pack_state(h0, c0):
    """(4, B, H) h & c (PyTorch order [l0_f, l0_b, l1_f, l1_b]) -> packed (B, 8H) f32."""
    _, B, H = h0.shape
    h = jnp.transpose(h0, (1, 0, 2)).reshape(B, 4 * H)
    c = jnp.transpose(c0, (1, 0, 2)).reshape(B, 4 * H)
    return jnp.concatenate([h, c], axis=1)


def unpack_state(s, n_hidden):
    """Packed (B, 8H) -> ((4, B, H) h, (4, B, H) c)."""
    B = s.shape[0]
    H = n_hidden
    h = jnp.transpose(s[:, :4 * H].reshape(B, 4, H), (1, 0, 2))
    c = jnp.transpose(s[:, 4 * H:].reshape(B, 4, H), (1, 0, 2))
    return h, c


# ---------------------------------------------------------------------------
# wrapper: no per-call repacking; packed state in -> packed state out (aliased)
# ---------------------------------------------------------------------------
@functools.partial(jax.jit, static_argnames=("n_input", "n_hidden"))
def rnn_forward(x, wb_slab, state, *, n_input, n_hidden):
    B = x.shape[0]
    H8 = 8 * n_hidden
    vmem = pl.BlockSpec(memory_space=pltpu.MemorySpace.VMEM)
    y_pad, new_state = pl.pallas_call(
        _make_rnn_kernel(n_input, n_hidden),
        out_shape=(jax.ShapeDtypeStruct((B, H8), jnp.float32),   # lane-dense padded y
                   jax.ShapeDtypeStruct((B, H8), jnp.float32)),  # packed [h | c] state
        in_specs=[vmem, vmem, vmem],
        out_specs=(vmem, vmem),
        input_output_aliases={2: 1},     # state slab updated in place
    )(wb_slab, x, state)
    return y_pad, new_state


# ---------------------------------------------------------------------------
# pure-JAX reference (mirrors the PyTorch forward, eval mode)
# ---------------------------------------------------------------------------
def rnn_reference(x, params, h0, c0, n_hidden, compute_dtype=jnp.float32):
    H = n_hidden
    cd = compute_dtype

    def mm(a, w):
        return jnp.dot(a.astype(cd), w.astype(cd), preferred_element_type=jnp.float32)

    def cell(xin, h, c, wih, whh, b):
        g = mm(xin, wih) + mm(h, whh) + b
        i = jax.nn.sigmoid(g[:, :H])
        f = jax.nn.sigmoid(g[:, H:2 * H])
        gg = jnp.tanh(g[:, 2 * H:3 * H])
        o = jax.nn.sigmoid(g[:, 3 * H:])
        c_new = f * c + i * gg
        return o * jnp.tanh(c_new), c_new

    x1 = jax.nn.relu(mm(x, params["w1"]) + params["b1"])
    hf0, cf0 = cell(x1, h0[0], c0[0], params["wih0f"], params["whh0f"], params["bias0f"])
    hb0, cb0 = cell(x1, h0[1], c0[1], params["wih0b"], params["whh0b"], params["bias0b"])
    out0 = jnp.concatenate([hf0, hb0], axis=1)
    hf1, cf1 = cell(out0, h0[2], c0[2], params["wih1f"], params["whh1f"], params["bias1f"])
    hb1, cb1 = cell(out0, h0[3], c0[3], params["wih1b"], params["whh1b"], params["bias1b"])
    out1 = jnp.concatenate([hf1, hb1], axis=1)
    y = mm(out1, params["w2"]) + params["b2"]
    hn = jnp.stack([hf0, hb0, hf1, hb1])
    cn = jnp.stack([cf0, cb0, cf1, cb1])
    return y, hn, cn


if __name__ == "__main__":
    B, n_input, n_hidden, n_output = 4, 24, 32, 18

    key = jax.random.PRNGKey(0)
    k_x, k_p, k_h, k_c = jax.random.split(key, 4)
    x = jax.random.normal(k_x, (B, n_input), dtype=jnp.float32)

    params = init_params(k_p, n_input, n_output, n_hidden)
    params_q = quantize_bf16(params)                     # values the bf16 slab actually holds
    wb_slab = pack_params(params_q, n_input, n_output, n_hidden)

    # h=None in the PyTorch forward -> zero initial states; use nonzero states here to
    # exercise the recurrent-weight path as well (zeros are also supported).
    h0 = 0.1 * jax.random.normal(k_h, (4, B, n_hidden), dtype=jnp.float32)
    c0 = 0.1 * jax.random.normal(k_c, (4, B, n_hidden), dtype=jnp.float32)
    state = pack_state(h0, c0)                           # done once, at the sequence boundary

    y_pad, new_state = rnn_forward(x, wb_slab, state, n_input=n_input, n_hidden=n_hidden)
    jax.block_until_ready((y_pad, new_state))

    y = y_pad[:, :n_output]
    hn, cn = unpack_state(new_state, n_hidden)

    # strong structural check: same bf16-rounded weights + bf16 matmul operands, f32 accum
    y_q, hn_q, cn_q = rnn_reference(x, params_q, h0, c0, n_hidden, compute_dtype=jnp.bfloat16)
    assert jnp.allclose(y, y_q, atol=1e-3), "output mismatch vs bf16 reference"
    assert jnp.allclose(hn, hn_q, atol=1e-3), "h_n mismatch vs bf16 reference"
    assert jnp.allclose(cn, cn_q, atol=1e-3), "c_n mismatch vs bf16 reference"

    # sanity check vs the original full-f32 module semantics (bf16 quantization noise only)
    y_f, hn_f, cn_f = rnn_reference(x, params, h0, c0, n_hidden)
    assert jnp.allclose(y, y_f, atol=5e-2), "output drift vs f32 reference too large"
    assert jnp.allclose(hn, hn_f, atol=5e-2), "h_n drift vs f32 reference too large"
    assert jnp.allclose(cn, cn_f, atol=5e-2), "c_n drift vs f32 reference too large"

    print("KERNEL_OK")
</pallas_src>

<mosaic_0001>
module attributes {stable_mosaic.version = 11 : i64} {
  func.func @kernel(%arg0: memref<328x512xbf16, #tpu.memory_space<vmem>>, %arg1: memref<4x24xf32, #tpu.memory_space<vmem>>, %arg2: memref<4x256xf32, #tpu.memory_space<vmem>>, %arg3: memref<4x256xf32, #tpu.memory_space<vmem>>, %arg4: memref<4x256xf32, #tpu.memory_space<vmem>>) attributes {dimension_semantics = [], scalar_prefetch = 0 : i64, scratch_operands = 0 : i64, tpu.core_type = #tpu.core_type<tc>} {
    %c0 = arith.constant 0 : index
    %c0_0 = arith.constant 0 : index
    %0 = vector.load %arg2[%c0, %c0_0] : memref<4x256xf32, #tpu.memory_space<vmem>>, vector<4x256xf32>
    %1 = vector.extract_strided_slice %0 {offsets = [0, 0], sizes = [4, 128], strides = [1, 1]} : vector<4x256xf32> to vector<4x128xf32>
    %2 = arith.truncf %1 : vector<4x128xf32> to vector<4x128xbf16>
    %3 = vector.extract_strided_slice %0 {offsets = [0, 128], sizes = [4, 64], strides = [1, 1]} : vector<4x256xf32> to vector<4x64xf32>
    %4 = vector.extract_strided_slice %0 {offsets = [0, 192], sizes = [4, 64], strides = [1, 1]} : vector<4x256xf32> to vector<4x64xf32>
    %c128 = arith.constant 128 : index
    %c0_1 = arith.constant 0 : index
    %5 = vector.load %arg0[%c128, %c0_1] : memref<328x512xbf16, #tpu.memory_space<vmem>>, vector<128x512xbf16>
    %cst = arith.constant dense<0.000000e+00> : vector<4x512xf32>
    %6 = tpu.matmul %2, %5, %cst {dimension_numbers = #tpu.dot_dimension_numbers<[1], [0], [0], [1], [0, 0, 1, 1], [], []>} : vector<4x128xbf16>, vector<128x512xbf16>, vector<4x512xf32> -> vector<4x512xf32>
    %7 = vector.extract_strided_slice %6 {offsets = [0, 0], sizes = [4, 256], strides = [1, 1]} : vector<4x512xf32> to vector<4x256xf32>
    %8 = vector.extract_strided_slice %6 {offsets = [0, 256], sizes = [4, 256], strides = [1, 1]} : vector<4x512xf32> to vector<4x256xf32>
    %c320 = arith.constant 320 : index
    %c0_2 = arith.constant 0 : index
    %9 = vector.load %arg0[%c320, %c0_2] : memref<328x512xbf16, #tpu.memory_space<vmem>>, vector<1x32xbf16>
    %10 = arith.extf %9 : vector<1x32xbf16> to vector<1x32xf32>
    %c321 = arith.constant 321 : index
    %c0_3 = arith.constant 0 : index
    %11 = vector.load %arg0[%c321, %c0_3] : memref<328x512xbf16, #tpu.memory_space<vmem>>, vector<1x512xbf16>
    %12 = arith.extf %11 : vector<1x512xbf16> to vector<1x512xf32>
    %c322 = arith.constant 322 : index
    %c0_4 = arith.constant 0 : index
    %13 = vector.load %arg0[%c322, %c0_4] : memref<328x512xbf16, #tpu.memory_space<vmem>>, vector<1x256xbf16>
    %14 = arith.extf %13 : vector<1x256xbf16> to vector<1x256xf32>
    %c0_5 = arith.constant 0 : index
    %c0_6 = arith.constant 0 : index
    %15 = vector.load %arg1[%c0_5, %c0_6] : memref<4x24xf32, #tpu.memory_space<vmem>>, vector<4x24xf32>
    %16 = arith.truncf %15 : vector<4x24xf32> to vector<4x24xbf16>
    %c0_7 = arith.constant 0 : index
    %c0_8 = arith.constant 0 : index
    %17 = vector.load %arg0[%c0_7, %c0_8] : memref<328x512xbf16, #tpu.memory_space<vmem>>, vector<24x32xbf16>
    %cst_9 = arith.constant dense<0.000000e+00> : vector<4x32xf32>
    %18 = tpu.matmul %16, %17, %cst_9 {dimension_numbers = #tpu.dot_dimension_numbers<[1], [0], [0], [1], [0, 0, 1, 1], [], []>} : vector<4x24xbf16>, vector<24x32xbf16>, vector<4x32xf32> -> vector<4x32xf32>
    %19 = vector.broadcast %10 : vector<1x32xf32> to vector<4x32xf32>
    %20 = arith.addf %18, %19 : vector<4x32xf32>
    %cst_10 = arith.constant 0.000000e+00 : f32
    %21 = vector.broadcast %cst_10 : f32 to vector<4x32xf32>
    %22 = arith.maximumf %20, %21 : vector<4x32xf32>
    %c32 = arith.constant 32 : index
    %c0_11 = arith.constant 0 : index
    %23 = vector.load %arg0[%c32, %c0_11] : memref<328x512xbf16, #tpu.memory_space<vmem>>, vector<32x256xbf16>
    %24 = arith.truncf %22 : vector<4x32xf32> to vector<4x32xbf16>
    %cst_12 = arith.constant dense<0.000000e+00> : vector<4x256xf32>
    %25 = tpu.matmul %24, %23, %cst_12 {dimension_numbers = #tpu.dot_dimension_numbers<[1], [0], [0], [1], [0, 0, 1, 1], [], []>} : vector<4x32xbf16>, vector<32x256xbf16>, vector<4x256xf32> -> vector<4x256xf32>
    %26 = arith.addf %25, %7 : vector<4x256xf32>
    %27 = vector.extract_strided_slice %12 {offsets = [0, 0], sizes = [1, 256], strides = [1, 1]} : vector<1x512xf32> to vector<1x256xf32>
    %28 = vector.broadcast %27 : vector<1x256xf32> to vector<4x256xf32>
    %29 = arith.addf %26, %28 : vector<4x256xf32>
    %30 = arith.negf %29 : vector<4x256xf32>
    %31 = math.exp %30 : vector<4x256xf32>
    %cst_13 = arith.constant 1.000000e+00 : f32
    %32 = vector.broadcast %cst_13 : f32 to vector<4x256xf32>
    %33 = arith.addf %32, %31 : vector<4x256xf32>
    %34 = arith.divf %32, %33 : vector<4x256xf32>
    %35 = vector.extract_strided_slice %29 {offsets = [0, 128], sizes = [4, 128], strides = [1, 1]} : vector<4x256xf32> to vector<4x128xf32>
    %36 = math.tanh %35 : vector<4x128xf32>
    %37 = vector.extract_strided_slice %34 {offsets = [0, 0], sizes = [4, 64], strides = [1, 1]} : vector<4x256xf32> to vector<4x64xf32>
    %38 = vector.extract_strided_slice %34 {offsets = [0, 64], sizes = [4, 64], strides = [1, 1]} : vector<4x256xf32> to vector<4x64xf32>
    %39 = vector.extract_strided_slice %34 {offsets = [0, 128], sizes = [4, 64], strides = [1, 1]} : vector<4x256xf32> to vector<4x64xf32>
    %40 = vector.extract_strided_slice %36 {offsets = [0, 64], sizes = [4, 64], strides = [1, 1]} : vector<4x128xf32> to vector<4x64xf32>
    %41 = arith.mulf %38, %3 : vector<4x64xf32>
    %42 = arith.mulf %37, %40 : vector<4x64xf32>
    %43 = arith.addf %41, %42 : vector<4x64xf32>
    %44 = math.tanh %43 : vector<4x64xf32>
    %45 = arith.mulf %39, %44 : vector<4x64xf32>
    %c0_14 = arith.constant 0 : index
    %c0_15 = arith.constant 0 : index
    %46 = vector.load %arg4[%c0_14, %c0_15] : memref<4x256xf32, #tpu.memory_space<vmem>>, vector<4x64xf32>
    tpu.vector_store %arg4[%c0_14, %c0_15], %45 {strides = array<i32>} : memref<4x256xf32, #tpu.memory_space<vmem>>, vector<4x64xf32>,
    %c0_16 = arith.constant 0 : index
    %c128_17 = arith.constant 128 : index
    %47 = vector.load %arg4[%c0_16, %c128_17] : memref<4x256xf32, #tpu.memory_space<vmem>>, vector<4x64xf32>
    tpu.vector_store %arg4[%c0_16, %c128_17], %43 {strides = array<i32>} : memref<4x256xf32, #tpu.memory_space<vmem>>, vector<4x64xf32>,
    %c64 = arith.constant 64 : index
    %c0_18 = arith.constant 0 : index
    %48 = vector.load %arg0[%c64, %c0_18] : memref<328x512xbf16, #tpu.memory_space<vmem>>, vector<64x256xbf16>
    %49 = arith.truncf %45 : vector<4x64xf32> to vector<4x64xbf16>
    %cst_19 = arith.constant dense<0.000000e+00> : vector<4x256xf32>
    %50 = tpu.matmul %49, %48, %cst_19 {dimension_numbers = #tpu.dot_dimension_numbers<[1], [0], [0], [1], [0, 0, 1, 1], [], []>} : vector<4x64xbf16>, vector<64x256xbf16>, vector<4x256xf32> -> vector<4x256xf32>
    %51 = arith.addf %50, %8 : vector<4x256xf32>
    %52 = vector.extract_strided_slice %12 {offsets = [0, 256], sizes = [1, 256], strides = [1, 1]} : vector<1x512xf32> to vector<1x256xf32>
    %53 = vector.broadcast %52 : vector<1x256xf32> to vector<4x256xf32>
    %54 = arith.addf %51, %53 : vector<4x256xf32>
    %55 = arith.negf %54 : vector<4x256xf32>
    %56 = math.exp %55 : vector<4x256xf32>
    %cst_20 = arith.constant 1.000000e+00 : f32
    %57 = vector.broadcast %cst_20 : f32 to vector<4x256xf32>
    %58 = arith.addf %57, %56 : vector<4x256xf32>
    %59 = arith.divf %57, %58 : vector<4x256xf32>
    %60 = vector.extract_strided_slice %54 {offsets = [0, 128], sizes = [4, 128], strides = [1, 1]} : vector<4x256xf32> to vector<4x128xf32>
    %61 = math.tanh %60 : vector<4x128xf32>
    %62 = vector.extract_strided_slice %59 {offsets = [0, 0], sizes = [4, 64], strides = [1, 1]} : vector<4x256xf32> to vector<4x64xf32>
    %63 = vector.extract_strided_slice %59 {offsets = [0, 64], sizes = [4, 64], strides = [1, 1]} : vector<4x256xf32> to vector<4x64xf32>
    %64 = vector.extract_strided_slice %59 {offsets = [0, 128], sizes = [4, 64], strides = [1, 1]} : vector<4x256xf32> to vector<4x64xf32>
    %65 = vector.extract_strided_slice %61 {offsets = [0, 64], sizes = [4, 64], strides = [1, 1]} : vector<4x128xf32> to vector<4x64xf32>
    %66 = arith.mulf %63, %4 : vector<4x64xf32>
    %67 = arith.mulf %62, %65 : vector<4x64xf32>
    %68 = arith.addf %66, %67 : vector<4x64xf32>
    %69 = math.tanh %68 : vector<4x64xf32>
    %70 = arith.mulf %64, %69 : vector<4x64xf32>
    %c0_21 = arith.constant 0 : index
    %c64_22 = arith.constant 64 : index
    %71 = vector.load %arg4[%c0_21, %c64_22] : memref<4x256xf32, #tpu.memory_space<vmem>>, vector<4x64xf32>
    tpu.vector_store %arg4[%c0_21, %c64_22], %70 {strides = array<i32>} : memref<4x256xf32, #tpu.memory_space<vmem>>, vector<4x64xf32>,
    %c0_23 = arith.constant 0 : index
    %c192 = arith.constant 192 : index
    %72 = vector.load %arg4[%c0_23, %c192] : memref<4x256xf32, #tpu.memory_space<vmem>>, vector<4x64xf32>
    tpu.vector_store %arg4[%c0_23, %c192], %68 {strides = array<i32>} : memref<4x256xf32, #tpu.memory_space<vmem>>, vector<4x64xf32>,
    %c256 = arith.constant 256 : index
    %c0_24 = arith.constant 0 : index
    %73 = vector.load %arg0[%c256, %c0_24] : memref<328x512xbf16, #tpu.memory_space<vmem>>, vector<64x256xbf16>
    %74 = arith.truncf %70 : vector<4x64xf32> to vector<4x64xbf16>
    %cst_25 = arith.constant dense<0.000000e+00> : vector<4x256xf32>
    %75 = tpu.matmul %74, %73, %cst_25 {dimension_numbers = #tpu.dot_dimension_numbers<[1], [0], [0], [1], [0, 0, 1, 1], [], []>} : vector<4x64xbf16>, vector<64x256xbf16>, vector<4x256xf32> -> vector<4x256xf32>
    %76 = vector.broadcast %14 : vector<1x256xf32> to vector<4x256xf32>
    %77 = arith.addf %75, %76 : vector<4x256xf32>
    %c0_26 = arith.constant 0 : index
    %c0_27 = arith.constant 0 : index
    %78 = vector.load %arg3[%c0_26, %c0_27] : memref<4x256xf32, #tpu.memory_space<vmem>>, vector<4x256xf32>
    tpu.vector_store %arg3[%c0_26, %c0_27], %77 {strides = array<i32>} : memref<4x256xf32, #tpu.memory_space<vmem>>, vector<4x256xf32>,
    return
  }
}

</mosaic_0001>

<llo_original>
// kernel: rnn_forward.1
$region0: #{rnn_forward.1}
  #allocation0 [shape = 'u32[]', space=smem, size = 0x4, offset = 0x4, fixed_abs, tag = 'smem constant byte address 0x4 - core index']
  #allocation1 [shape = 'u32[144,128]{1,0:T(1,128)}', space=vmem, size = 0x12000, scoped, tag = 'internal scratch']
  %s0 = inlined_call_operand.hbm [shape: bf16[328,512], index: 0, kind: input, shape index: {}]
  %s1 = inlined_call_operand.vmem [shape: f32[4,24], index: 1, kind: input, shape index: {}]
  %s2 = inlined_call_operand.hbm [shape: f32[4,256], index: 2, kind: input, shape index: {}, may-alias: {2,4}]
  %s3 = inlined_call_operand.hbm [shape: f32[4,256], index: 3, kind: output, shape index: {0}]
  %s4 = inlined_call_operand.hbm [shape: f32[4,256], index: 4, kind: output, shape index: {1}, may-alias: {2,4}]
  %5 = xla_tuple %s3, %s4
  %s6 = sld [smem:[#allocation0]]
  $region38: #{rnn_forward.1} parent=0
    _
  %s8 = ssub.s32 1, %s6
  %s9 = scalar_select 0, %s8, %s6
  $region1: #{rnn_forward.1} parent=0
    #allocation2 [shape = 'u8[335872]{0}', space=vmem, size = 0x52000, scoped, tag = 'input window, operand 0, single buffered']
    #allocation3 [shape = 's32[1]{0}', space=sflag, size = 0x4, scoped, tag = 'scoped memory for rnn_forward.1']
    #allocation4 [shape = 's32[1]{0}', space=sflag, size = 0x4, scoped, tag = 'scoped memory for rnn_forward.1']
    #allocation5 [shape = 'u8[4096]{0}', space=vmem, size = 0x1000, scoped, tag = 'input window, operand 2, single buffered']
    #allocation6 [shape = 's32[1]{0}', space=sflag, size = 0x4, scoped, tag = 'scoped memory for rnn_forward.1']
    #allocation7 [shape = 'u8[4096]{0}', space=vmem, size = 0x1000, scoped, tag = 'output window, operand 0, single buffered']
    #allocation8 [shape = 'u8[4096]{0}', space=vmem, size = 0x1000, scoped, tag = 'output window, operand 1, single buffered']
    #allocation9 [shape = 's32[1]{0}', space=sflag, size = 0x4, scoped, tag = 'scoped memory for rnn_forward.1']
    %10 = vsyncpa [#allocation3], 0
    %11 = vsyncpa [#allocation6], 0
    %12 = vsyncpa [#allocation4], 0
    %13 = vsyncpa [#allocation9], 0
    // Predicated region
    $region2: #{rnn_forward.1} parent=1 // pred_check
      _
    $region3: #{rnn_forward.1} parent=1 // pred_check_branch
      %15 = sbr.rel (0) target = $region5
    $region4: #{rnn_forward.1} parent=1 // pred_region
      %s17 = ssub.s32 10496, 10496
      %18 = vsyncadd [#allocation3], %s17
      %s19 = sshll.u32 [#allocation2], 4
      %s20 = int_to_ptr.vmem [resolvable:$true] %s19
      %25 = dma.hbm_to_vmem [thread:$0]  %s0, 10496, %s20, [#allocation3], 256, 256, 16
    $region5: #{rnn_forward.1} parent=1 // pred_fallthru
      _
    // Predicated region
    $region6: #{rnn_forward.1} parent=1 // pred_check
      _
    $region7: #{rnn_forward.1} parent=1 // pred_check_branch
      %27 = sbr.rel (0) target = $region9
    $region8: #{rnn_forward.1} parent=1 // pred_region
      _
    $region9: #{rnn_forward.1} parent=1 // pred_fallthru
      _
    // Predicated region
    $region10: #{rnn_forward.1} parent=1 // pred_check
      _
    $region11: #{rnn_forward.1} parent=1 // pred_check_branch
      %29 = sbr.rel (0) target = $region13
    $region12: #{rnn_forward.1} parent=1 // pred_region
      %s31 = ssub.s32 128, 128
      %32 = vsyncadd [#allocation6], %s31
      %s34 = sshll.u32 [#allocation5], 4
      %s35 = int_to_ptr.vmem [resolvable:$true] %s34
      %37 = dma.hbm_to_vmem [thread:$0]  %s2, 128, %s35, [#allocation6]
    $region13: #{rnn_forward.1} parent=1 // pred_fallthru
      _
    // Predicated region
    $region14: #{rnn_forward.1} parent=1 // pred_check
      _
    $region15: #{rnn_forward.1} parent=1 // pred_check_branch
      %39 = sbr.rel (0) target = $region17
    $region16: #{rnn_forward.1} parent=1 // pred_region
      %40 = dma.done [#allocation3], 10496
    $region17: #{rnn_forward.1} parent=1 // pred_fallthru
      _
    // Predicated region
    $region18: #{rnn_forward.1} parent=1 // pred_check
      _
    $region19: #{rnn_forward.1} parent=1 // pred_check_branch
      %42 = sbr.rel (0) target = $region21
    $region20: #{rnn_forward.1} parent=1 // pred_region
      %43 = dma.done [#allocation6], 128
    $region21: #{rnn_forward.1} parent=1 // pred_fallthru
      _
    %v45 = vld [vmem:[#allocation5] sm:$0xff]
    %v46 = vpack.c.bf16 %v45, %v45
    %v47 = vld [vmem:[#allocation2 + $0x100] sm:$0xff]
    %v48 = vld [vmem:[#allocation2 + $0x108] sm:$0xff]
    %v49 = vld [vmem:[#allocation2 + $0x110] sm:$0xff]
    %v50 = vld [vmem:[#allocation2 + $0x118] sm:$0xff]
    %v51 = vld [vmem:[#allocation2 + $0x120] sm:$0xff]
    %v52 = vld [vmem:[#allocation2 + $0x128] sm:$0xff]
    %v53 = vld [vmem:[#allocation2 + $0x130] sm:$0xff]
    %v54 = vld [vmem:[#allocation2 + $0x138] sm:$0xff]
    %v55 = vld [vmem:[#allocation2 + $0x140] sm:$0xff]
    %v56 = vld [vmem:[#allocation2 + $0x148] sm:$0xff]
    %v57 = vld [vmem:[#allocation2 + $0x150] sm:$0xff]
    %v58 = vld [vmem:[#allocation2 + $0x158] sm:$0xff]
    %v59 = vld [vmem:[#allocation2 + $0x160] sm:$0xff]
    %v60 = vld [vmem:[#allocation2 + $0x168] sm:$0xff]
    %v61 = vld [vmem:[#allocation2 + $0x170] sm:$0xff]
    %v62 = vld [vmem:[#allocation2 + $0x178] sm:$0xff]
    %v63 = vld [vmem:[#allocation2 + $0x180] sm:$0xff]
    %v64 = vld [vmem:[#allocation2 + $0x188] sm:$0xff]
    %v65 = vld [vmem:[#allocation2 + $0x190] sm:$0xff]
    %v66 = vld [vmem:[#allocation2 + $0x198] sm:$0xff]
    %v67 = vld [vmem:[#allocation2 + $0x1a0] sm:$0xff]
    %v68 = vld [vmem:[#allocation2 + $0x1a8] sm:$0xff]
    %v69 = vld [vmem:[#allocation2 + $0x1b0] sm:$0xff]
    %v70 = vld [vmem:[#allocation2 + $0x1b8] sm:$0xff]
    %v71 = vld [vmem:[#allocation2 + $0x1c0] sm:$0xff]
    %v72 = vld [vmem:[#allocation2 + $0x1c8] sm:$0xff]
    %v73 = vld [vmem:[#allocation2 + $0x1d0] sm:$0xff]
    %v74 = vld [vmem:[#allocation2 + $0x1d8] sm:$0xff]
    %v75 = vld [vmem:[#allocation2 + $0x1e0] sm:$0xff]
    %v76 = vld [vmem:[#allocation2 + $0x1e8] sm:$0xff]
    %v77 = vld [vmem:[#allocation2 + $0x1f0] sm:$0xff]
    %v78 = vld [vmem:[#allocation2 + $0x1f8] sm:$0xff]
    %v111 = vunpack.c.l.b16 %v47
    %v112 = vunpack.c.h.b16 %v47
    %v113 = vunpack.c.l.b16 %v48
    %v114 = vunpack.c.h.b16 %v48
    %v115 = vunpack.c.l.b16 %v49
    %v116 = vunpack.c.h.b16 %v49
    %v117 = vunpack.c.l.b16 %v50
    %v118 = vunpack.c.h.b16 %v50
    %v119 = vunpack.c.l.b16 %v51
    %v120 = vunpack.c.h.b16 %v51
    %v121 = vunpack.c.l.b16 %v52
    %v122 = vunpack.c.h.b16 %v52
    %v123 = vunpack.c.l.b16 %v53
    %v124 = vunpack.c.h.b16 %v53
    %v125 = vunpack.c.l.b16 %v54
    %v126 = vunpack.c.h.b16 %v54
    %v127 = vunpack.c.l.b16 %v55
    %v128 = vunpack.c.h.b16 %v55
    %v129 = vunpack.c.l.b16 %v56
    %v130 = vunpack.c.h.b16 %v56
    %v131 = vunpack.c.l.b16 %v57
    %v132 = vunpack.c.h.b16 %v57
    %v133 = vunpack.c.l.b16 %v58
    %v134 = vunpack.c.h.b16 %v58
    %v135 = vunpack.c.l.b16 %v59
    %v136 = vunpack.c.h.b16 %v59
    %v137 = vunpack.c.l.b16 %v60
    %v138 = vunpack.c.h.b16 %v60
    %v139 = vunpack.c.l.b16 %v61
    %v140 = vunpack.c.h.b16 %v61
    %v141 = vunpack.c.l.b16 %v62
    %v142 = vunpack.c.h.b16 %v62
    %v143 = vunpack.c.l.b16 %v63
    %v144 = vunpack.c.h.b16 %v63
    %v145 = vunpack.c.l.b16 %v64
    %v146 = vunpack.c.h.b16 %v64
    %v147 = vunpack.c.l.b16 %v65
    %v148 = vunpack.c.h.b16 %v65
    %v149 = vunpack.c.l.b16 %v66
    %v150 = vunpack.c.h.b16 %v66
    %v151 = vunpack.c.l.b16 %v67
    %v152 = vunpack.c.h.b16 %v67
    %v153 = vunpack.c.l.b16 %v68
    %v154 = vunpack.c.h.b16 %v68
    %v155 = vunpack.c.l.b16 %v69
    %v156 = vunpack.c.h.b16 %v69
    %v157 = vunpack.c.l.b16 %v70
    %v158 = vunpack.c.h.b16 %v70
    %v159 = vunpack.c.l.b16 %v71
    %v160 = vunpack.c.h.b16 %v71
    %v161 = vunpack.c.l.b16 %v72
    %v162 = vunpack.c.h.b16 %v72
    %v163 = vunpack.c.l.b16 %v73
    %v164 = vunpack.c.h.b16 %v73
    %v165 = vunpack.c.l.b16 %v74
    %v166 = vunpack.c.h.b16 %v74
    %v167 = vunpack.c.l.b16 %v75
    %v168 = vunpack.c.h.b16 %v75
    %v169 = vunpack.c.l.b16 %v76
    %v170 = vunpack.c.h.b16 %v76
    %v171 = vunpack.c.l.b16 %v77
    %v172 = vunpack.c.h.b16 %v77
    %v173 = vunpack.c.l.b16 %v78
    %v174 = vunpack.c.h.b16 %v78
    %v175 = vpack.c.b16 %v115, %v111
    %v176 = vpack.c.b16 %v116, %v112
    %v177 = vpack.c.b16 %v117, %v113
    %v178 = vpack.c.b16 %v118, %v114
    %v179 = vpack.c.b16 %v123, %v119
    %v180 = vpack.c.b16 %v124, %v120
    %v181 = vpack.c.b16 %v125, %v121
    %v182 = vpack.c.b16 %v126, %v122
    %v183 = vpack.c.b16 %v131, %v127
    %v184 = vpack.c.b16 %v132, %v128
    %v185 = vpack.c.b16 %v133, %v129
    %v186 = vpack.c.b16 %v134, %v130
    %v187 = vpack.c.b16 %v139, %v135
    %v188 = vpack.c.b16 %v140, %v136
    %v189 = vpack.c.b16 %v141, %v137
    %v190 = vpack.c.b16 %v142, %v138
    %v191 = vpack.c.b16 %v147, %v143
    %v192 = vpack.c.b16 %v148, %v144
    %v193 = vpack.c.b16 %v149, %v145
    %v194 = vpack.c.b16 %v150, %v146
    %v195 = vpack.c.b16 %v155, %v151
    %v196 = vpack.c.b16 %v156, %v152
    %v197 = vpack.c.b16 %v157, %v153
    %v198 = vpack.c.b16 %v158, %v154
    %v199 = vpack.c.b16 %v163, %v159
    %v200 = vpack.c.b16 %v164, %v160
    %v201 = vpack.c.b16 %v165, %v161
    %v202 = vpack.c.b16 %v166, %v162
    %v203 = vpack.c.b16 %v171, %v167
    %v204 = vpack.c.b16 %v172, %v168
    %v205 = vpack.c.b16 %v173, %v169
    %v206 = vpack.c.b16 %v174, %v170
    %239 = vmatprep.subr.bf16.mxu0 %v204
    %240 = vmatpush1.bf16.msra.mxu0 %v203
    %241 = vmatprep.subr.bf16.mxu0 %v200
    %242 = vmatpush1.bf16.msra.mxu0 %v199
    %243 = vmatprep.subr.bf16.mxu0 %v196
    %244 = vmatpush1.bf16.msra.mxu0 %v195
    %245 = vmatprep.subr.bf16.mxu0 %v192
    %246 = vmatpush1.bf16.msra.mxu0 %v191
    %247 = vmatprep.subr.bf16.mxu0 %v188
    %248 = vmatpush1.bf16.msra.mxu0 %v187
    %249 = vmatprep.subr.bf16.mxu0 %v184
    %250 = vmatpush1.bf16.msra.mxu0 %v183
    %251 = vmatprep.subr.bf16.mxu0 %v180
    %252 = vmatpush1.bf16.msra.mxu0 %v179
    %253 = vmatprep.subr.bf16.mxu0 %v176
    %254 = vmatpush1.bf16.msra.mxu0 %v175
    %255 = vmatprep.subr.bf16.mxu0 0
    %256 = vmatpush2.bf16.msra.mxu0 0
    %257 = vmatprep.subr.bf16.mxu0 0
    %258 = vmatpush2.bf16.msra.mxu0 0
    %259 = vmatprep.subr.bf16.mxu0 0
    %260 = vmatpush2.bf16.msra.mxu0 0
    %261 = vmatprep.subr.bf16.mxu0 0
    %262 = vmatpush2.bf16.msra.mxu0 0
    %263 = vmatprep.subr.bf16.mxu0 0
    %264 = vmatpush2.bf16.msra.mxu0 0
    %265 = vmatprep.subr.bf16.mxu0 0
    %266 = vmatpush2.bf16.msra.mxu0 0
    %267 = vmatprep.subr.bf16.mxu0 0
    %268 = vmatpush2.bf16.msra.mxu0 0
    %269 = vmatprep.subr.bf16.mxu0 0
    %270 = vmatpush2.bf16.msra.mxu0 0
    %271 = vmatprep.mubr.bf16.mxu0 0
    %272 = vmatmul.mubr.bf16.gmra.mxu0 %v46
    %v273 = vpop.f32.mrf.mxu0
    %v274 = vadd.f32 0.0, %v273
    %v275 = vpop.f32.mrf.mxu0
    %v276 = vadd.f32 0.0, %v275
    %v277 = vpop.f32.mrf.mxu0
    %v278 = vpop.f32.mrf.mxu0
    %279 = vdwg.mxu0
    %280 = vmatprep.subr.bf16.mxu0 %v206
    %281 = vmatpush1.bf16.msra.mxu0 %v205
    %282 = vmatprep.subr.bf16.mxu0 %v202
    %283 = vmatpush1.bf16.msra.mxu0 %v201
    %284 = vmatprep.subr.bf16.mxu0 %v198
    %285 = vmatpush1.bf16.msra.mxu0 %v197
    %286 = vmatprep.subr.bf16.mxu0 %v194
    %287 = vmatpush1.bf16.msra.mxu0 %v193
    %288 = vmatprep.subr.bf16.mxu0 %v190
    %289 = vmatpush1.bf16.msra.mxu0 %v189
    %290 = vmatprep.subr.bf16.mxu0 %v186
    %291 = vmatpush1.bf16.msra.mxu0 %v185
    %292 = vmatprep.subr.bf16.mxu0 %v182
    %293 = vmatpush1.bf16.msra.mxu0 %v181
    %294 = vmatprep.subr.bf16.mxu0 %v178
    %295 = vmatpush1.bf16.msra.mxu0 %v177
    %296 = vmatprep.subr.bf16.mxu0 0
    %297 = vmatpush2.bf16.msra.mxu0 0
    %298 = vmatprep.subr.bf16.mxu0 0
    %299 = vmatpush2.bf16.msra.mxu0 0
    %300 = vmatprep.subr.bf16.mxu0 0
    %301 = vmatpush2.bf16.msra.mxu0 0
    %302 = vmatprep.subr.bf16.mxu0 0
    %303 = vmatpush2.bf16.msra.mxu0 0
    %304 = vmatprep.subr.bf16.mxu0 0
    %305 = vmatpush2.bf16.msra.mxu0 0
    %306 = vmatprep.subr.bf16.mxu0 0
    %307 = vmatpush2.bf16.msra.mxu0 0
    %308 = vmatprep.subr.bf16.mxu0 0
    %309 = vmatpush2.bf16.msra.mxu0 0
    %310 = vmatprep.subr.bf16.mxu0 0
    %311 = vmatpush2.bf16.msra.mxu0 0
    %312 = vmatprep.mubr.bf16.mxu0 0
    %313 = vmatmul.mubr.bf16.gmra.mxu0 %v46
    %v314 = vpop.f32.mrf.mxu0
    %v315 = vadd.f32 0.0, %v314
    %v316 = vpop.f32.mrf.mxu0
    %v317 = vadd.f32 0.0, %v316
    %v318 = vpop.f32.mrf.mxu0
    %v319 = vpop.f32.mrf.mxu0
    %320 = vdwg.mxu0
    %v321 = vld [vmem:[#allocation2 + $0x280] sm:$0x1]
    %v322 = vunpack.c.l.bf16 %v321
    %v323 = vld [vmem:[#allocation2 + $0x280] sm:$0x11]
    %v324 = vld [vmem:[#allocation2 + $0x288] sm:$0x11]
    %v325 = vunpack.c.l.bf16 %v323
    %v326 = vunpack.c.h.bf16 %v323
    %v327 = vunpack.c.l.bf16 %v324
    %v328 = vunpack.c.h.bf16 %v324
    %v329 = vld [vmem:[#allocation2 + $0x280] sm:$0x22]
    %v330 = vunpack.c.l.bf16 %v329
    %v331 = vunpack.c.h.bf16 %v329
    %v332 = vld [vmem:[%s1] sm:$0xf]
    %v333 = vpack.c.bf16 %v332, %v332
    %v334 = vld [vmem:[#allocation2] sm:$0xf]
    %v335 = vld [vmem:[#allocation2 + $0x10] sm:$0xf]
    %v336 = vld [vmem:[#allocation2 + $0x20] sm:$0xf]
    %v337 = vlaneseq
    %v338 = vshrl.u32 %v337, 7
    %v339 = vsub.s32 0, %v338
    %v340 = vrot.slane %v322, %v339
    %v344 = vunpack.c.l.b16 %v334
    %v345 = vunpack.c.l.b16 %v335
    %v346 = vunpack.c.l.b16 %v336
    %v347 = vpack.c.b16 %v345, %v344
    %v348 = vpack.c.b16 %v346, %v346
    %vm350 = vcmask 195584
    %v352 = vsel %vm350, %v333, 0
    %vm354 = vcmask 1043456
    %v356 = vsel %vm354, %v348, 0
    %358 = vmatprep.subr.bf16.mxu0 0
    %359 = vmatpush1.bf16.msra.mxu0 0
    %360 = vmatprep.subr.bf16.mxu0 0
    %361 = vmatpush1.bf16.msra.mxu0 0
    %362 = vmatprep.subr.bf16.mxu0 0
    %363 = vmatpush1.bf16.msra.mxu0 0
    %364 = vmatprep.subr.bf16.mxu0 0
    %365 = vmatpush1.bf16.msra.mxu0 0
    %366 = vmatprep.subr.bf16.mxu0 0
    %367 = vmatpush1.bf16.msra.mxu0 0
    %368 = vmatprep.subr.bf16.mxu0 0
    %369 = vmatpush1.bf16.msra.mxu0 0
    %370 = vmatprep.subr.bf16.mxu0 0
    %371 = vmatpush1.bf16.msra.mxu0 %v356
    %372 = vmatprep.subr.bf16.mxu0 0
    %373 = vmatpush1.bf16.msra.mxu0 %v347
    %374 = vmatprep.subr.bf16.mxu0 0
    %375 = vmatpush2.bf16.msra.mxu0 0
    %376 = vmatprep.subr.bf16.mxu0 0
    %377 = vmatpush2.bf16.msra.mxu0 0
    %378 = vmatprep.subr.bf16.mxu0 0
    %379 = vmatpush2.bf16.msra.mxu0 0
    %380 = vmatprep.subr.bf16.mxu0 0
    %381 = vmatpush2.bf16.msra.mxu0 0
    %382 = vmatprep.subr.bf16.mxu0 0
    %383 = vmatpush2.bf16.msra.mxu0 0
    %384 = vmatprep.subr.bf16.mxu0 0
    %385 = vmatpush2.bf16.msra.mxu0 0
    %386 = vmatprep.subr.bf16.mxu0 0
    %387 = vmatpush2.bf16.msra.mxu0 0
    %388 = vmatprep.subr.bf16.mxu0 0
    %389 = vmatpush2.bf16.msra.mxu0 0
    %390 = vmatprep.mubr.bf16.mxu0 0
    %391 = vmatmul.mubr.bf16.gmra.mxu0 %v352
    %v392 = vpop.f32.mrf.mxu0
    %v393 = vadd.f32 %v340, %v392
    %v394 = vpop.f32.mrf.mxu0
    %v395 = vpop.f32.mrf.mxu0
    %v396 = vpop.f32.mrf.mxu0
    %397 = vdwg.mxu0
    %v398 = vmax.f32 %v393, 0.0
    %v399 = vld [vmem:[#allocation2 + $0x40] sm:$0xff]
    %v400 = vld [vmem:[#allocation2 + $0x50] sm:$0xff]
    %v401 = vld [vmem:[#allocation2 + $0x60] sm:$0xff]
    %v402 = vld [vmem:[#allocation2 + $0x70] sm:$0xff]
    %v403 = vpack.c.bf16 %v398, %v398
    %v408 = vunpack.c.l.b16 %v399
    %v409 = vunpack.c.h.b16 %v399
    %v410 = vunpack.c.l.b16 %v400
    %v411 = vunpack.c.h.b16 %v400
    %v412 = vunpack.c.l.b16 %v401
    %v413 = vunpack.c.h.b16 %v401
    %v414 = vunpack.c.l.b16 %v402
    %v415 = vunpack.c.h.b16 %v402
    %v416 = vpack.c.b16 %v410, %v408
    %v417 = vpack.c.b16 %v411, %v409
    %v418 = vpack.c.b16 %v414, %v412
    %v419 = vpack.c.b16 %v415, %v413
    %vm424 = vcmask 261120
    %v426 = vsel %vm424, %v403, 0
    %428 = vmatprep.subr.bf16.mxu0 0
    %429 = vmatpush1.bf16.msra.mxu0 0
    %430 = vmatprep.subr.bf16.mxu0 0
    %431 = vmatpush1.bf16.msra.mxu0 0
    %432 = vmatprep.subr.bf16.mxu0 0
    %433 = vmatpush1.bf16.msra.mxu0 0
    %434 = vmatprep.subr.bf16.mxu0 0
    %435 = vmatpush1.bf16.msra.mxu0 0
    %436 = vmatprep.subr.bf16.mxu0 0
    %437 = vmatpush1.bf16.msra.mxu0 0
    %438 = vmatprep.subr.bf16.mxu0 0
    %439 = vmatpush1.bf16.msra.mxu0 0
    %440 = vmatprep.subr.bf16.mxu0 %v419
    %441 = vmatpush1.bf16.msra.mxu0 %v418
    %442 = vmatprep.subr.bf16.mxu0 %v417
    %443 = vmatpush1.bf16.msra.mxu0 %v416
    %444 = vmatprep.subr.bf16.mxu0 0
    %445 = vmatpush2.bf16.msra.mxu0 0
    %446 = vmatprep.subr.bf16.mxu0 0
    %447 = vmatpush2.bf16.msra.mxu0 0
    %448 = vmatprep.subr.bf16.mxu0 0
    %449 = vmatpush2.bf16.msra.mxu0 0
    %450 = vmatprep.subr.bf16.mxu0 0
    %451 = vmatpush2.bf16.msra.mxu0 0
    %452 = vmatprep.subr.bf16.mxu0 0
    %453 = vmatpush2.bf16.msra.mxu0 0
    %454 = vmatprep.subr.bf16.mxu0 0
    %455 = vmatpush2.bf16.msra.mxu0 0
    %456 = vmatprep.subr.bf16.mxu0 0
    %457 = vmatpush2.bf16.msra.mxu0 0
    %458 = vmatprep.subr.bf16.mxu0 0
    %459 = vmatpush2.bf16.msra.mxu0 0
    %460 = vmatprep.mubr.bf16.mxu0 0
    %461 = vmatmul.mubr.bf16.gmra.mxu0 %v426
    %v462 = vpop.f32.mrf.mxu0
    %v463 = vadd.f32 %v274, %v462
    %v464 = vpop.f32.mrf.mxu0
    %v465 = vadd.f32 %v276, %v464
    %v466 = vpop.f32.mrf.mxu0
    %v467 = vpop.f32.mrf.mxu0
    %468 = vdwg.mxu0
    %v469 = vlaneseq
    %v470 = vshrl.u32 %v469, 7
    %v471 = vsub.s32 1, %v470
    %v472 = vrot.slane %v325, %v471
    %v473 = vlaneseq
    %v474 = vshrl.u32 %v473, 7
    %v475 = vsub.s32 1, %v474
    %v476 = vrot.slane %v326, %v475
    %v477 = vadd.f32 %v463, %v472
    %v478 = vadd.f32 %v465, %v476
    %v479 = vxor.u32 %v477, 2147483648
    %v480 = vxor.u32 %v478, 2147483648
    %v481 = vmul.f32 %v479, 1.442695
    %v482 = vpow.pop %v481
    %v483 = vmul.f32 %v480, 1.442695
    %v484 = vpow.pop %v483
    %v485 = vadd.f32 %v482, 1.0
    %v486 = vadd.f32 %v484, 1.0
    %v487 = vrcp.pop %v485
    %v488 = vmul.f32 1.0, %v487
    %v489 = vrcp.pop %v486
    %v490 = vmul.f32 1.0, %v489
    %v491 = vtanh.pop %v478
    %v493 = vcombine.high %v45, %v45
    %494 = vrot.lane.b32.xlu0 %v493, 64
    %v495 = vpop.permute.xlu0 %494
    %v497 = vmul.f32 %v488, %v495
    %499 = vrot.lane.b32.xlu0 %v491, 64
    %v500 = vpop.permute.xlu0 %499
    %v502 = vmul.f32 %v488, %v500
    %504 = vrot.lane.b32.xlu0 %v502, 64
    %v505 = vpop.permute.xlu0 %504
    %v507 = vadd.f32 %v497, %v505
    %v508 = vtanh.pop %v507
    %510 = vrot.lane.b32.xlu0 %v508, 64
    %v511 = vpop.permute.xlu0 %510
    %v513 = vmul.f32 %v490, %v511
    %vm514 = vcmask 519168
    %515 = vst.msk [vmem:[#allocation8] sm:$0xf] %vm514, %v513
    %517 = vrot.lane.b32.xlu0 %v507, 64
    %v518 = vpop.permute.xlu0 %517
    %520 = vst.msk [vmem:[#allocation8 + $0x4] sm:$0xf] %vm514, %v518
    %v521 = vld [vmem:[#allocation2 + $0x80] sm:$0xff]
    %v522 = vld [vmem:[#allocation2 + $0x90] sm:$0xff]
    %v523 = vld [vmem:[#allocation2 + $0xa0] sm:$0xff]
    %v524 = vld [vmem:[#allocation2 + $0xb0] sm:$0xff]
    %v525 = vld [vmem:[#allocation2 + $0xc0] sm:$0xff]
    %v526 = vld [vmem:[#allocation2 + $0xd0] sm:$0xff]
    %v527 = vld [vmem:[#allocation2 + $0xe0] sm:$0xff]
    %v528 = vld [vmem:[#allocation2 + $0xf0] sm:$0xff]
    %v529 = vpack.c.bf16 %v513, %v513
    %v538 = vunpack.c.l.b16 %v521
    %v539 = vunpack.c.h.b16 %v521
    %v540 = vunpack.c.l.b16 %v522
    %v541 = vunpack.c.h.b16 %v522
    %v542 = vunpack.c.l.b16 %v523
    %v543 = vunpack.c.h.b16 %v523
    %v544 = vunpack.c.l.b16 %v524
    %v545 = vunpack.c.h.b16 %v524
    %v546 = vunpack.c.l.b16 %v525
    %v547 = vunpack.c.h.b16 %v525
    %v548 = vunpack.c.l.b16 %v526
    %v549 = vunpack.c.h.b16 %v526
    %v550 = vunpack.c.l.b16 %v527
    %v551 = vunpack.c.h.b16 %v527
    %v552 = vunpack.c.l.b16 %v528
    %v553 = vunpack.c.h.b16 %v528
    %v554 = vpack.c.b16 %v540, %v538
    %v555 = vpack.c.b16 %v541, %v539
    %v556 = vpack.c.b16 %v544, %v542
    %v557 = vpack.c.b16 %v545, %v543
    %v558 = vpack.c.b16 %v548, %v546
    %v559 = vpack.c.b16 %v549, %v547
    %v560 = vpack.c.b16 %v552, %v550
    %v561 = vpack.c.b16 %v553, %v551
    %vm570 = vcmask 523264
    %v572 = vsel %vm570, %v529, 0
    %574 = vmatprep.subr.bf16.mxu0 0
    %575 = vmatpush1.bf16.msra.mxu0 0
    %576 = vmatprep.subr.bf16.mxu0 0
    %577 = vmatpush1.bf16.msra.mxu0 0
    %578 = vmatprep.subr.bf16.mxu0 0
    %579 = vmatpush1.bf16.msra.mxu0 0
    %580 = vmatprep.subr.bf16.mxu0 0
    %581 = vmatpush1.bf16.msra.mxu0 0
    %582 = vmatprep.subr.bf16.mxu0 %v561
    %583 = vmatpush1.bf16.msra.mxu0 %v560
    %584 = vmatprep.subr.bf16.mxu0 %v559
    %585 = vmatpush1.bf16.msra.mxu0 %v558
    %586 = vmatprep.subr.bf16.mxu0 %v557
    %587 = vmatpush1.bf16.msra.mxu0 %v556
    %588 = vmatprep.subr.bf16.mxu0 %v555
    %589 = vmatpush1.bf16.msra.mxu0 %v554
    %590 = vmatprep.subr.bf16.mxu0 0
    %591 = vmatpush2.bf16.msra.mxu0 0
    %592 = vmatprep.subr.bf16.mxu0 0
    %593 = vmatpush2.bf16.msra.mxu0 0
    %594 = vmatprep.subr.bf16.mxu0 0
    %595 = vmatpush2.bf16.msra.mxu0 0
    %596 = vmatprep.subr.bf16.mxu0 0
    %597 = vmatpush2.bf16.msra.mxu0 0
    %598 = vmatprep.subr.bf16.mxu0 0
    %599 = vmatpush2.bf16.msra.mxu0 0
    %600 = vmatprep.subr.bf16.mxu0 0
    %601 = vmatpush2.bf16.msra.mxu0 0
    %602 = vmatprep.subr.bf16.mxu0 0
    %603 = vmatpush2.bf16.msra.mxu0 0
    %604 = vmatprep.subr.bf16.mxu0 0
    %605 = vmatpush2.bf16.msra.mxu0 0
    %606 = vmatprep.mubr.bf16.mxu0 0
    %607 = vmatmul.mubr.bf16.gmra.mxu0 %v572
    %v608 = vpop.f32.mrf.mxu0
    %v609 = vadd.f32 %v315, %v608
    %v610 = vpop.f32.mrf.mxu0
    %v611 = vadd.f32 %v317, %v610
    %v612 = vpop.f32.mrf.mxu0
    %v613 = vpop.f32.mrf.mxu0
    %614 = vdwg.mxu0
    %v615 = vlaneseq
    %v616 = vshrl.u32 %v615, 7
    %v617 = vsub.s32 1, %v616
    %v618 = vrot.slane %v327, %v617
    %v619 = vlaneseq
    %v620 = vshrl.u32 %v619, 7
    %v621 = vsub.s32 1, %v620
    %v622 = vrot.slane %v328, %v621
    %v623 = vadd.f32 %v609, %v618
    %v624 = vadd.f32 %v611, %v622
    %v625 = vxor.u32 %v623, 2147483648
    %v626 = vxor.u32 %v624, 2147483648
    %v627 = vmul.f32 %v625, 1.442695
    %v628 = vpow.pop %v627
    %v629 = vmul.f32 %v626, 1.442695
    %v630 = vpow.pop %v629
    %v631 = vadd.f32 %v628, 1.0
    %v632 = vadd.f32 %v630, 1.0
    %v633 = vrcp.pop %v631
    %v634 = vmul.f32 1.0, %v633
    %v635 = vrcp.pop %v632
    %v636 = vmul.f32 1.0, %v635
    %v637 = vtanh.pop %v624
    %v639 = vmul.f32 %v634, %v493
    %641 = vrot.lane.b32.xlu0 %v637, 64
    %v642 = vpop.permute.xlu0 %641
    %v644 = vmul.f32 %v634, %v642
    %646 = vrot.lane.b32.xlu0 %v644, 64
    %v647 = vpop.permute.xlu0 %646
    %v649 = vadd.f32 %v639, %v647
    %v650 = vtanh.pop %v649
    %652 = vrot.lane.b32.xlu0 %v650, 64
    %v653 = vpop.permute.xlu0 %652
    %v655 = vmul.f32 %v636, %v653
    %657 = vrot.lane.b32.xlu0 %v655, 64
    %v658 = vpop.permute.xlu0 %657
    %vm660 = vcmask 1043968
    %661 = vst.msk [vmem:[#allocation8] sm:$0xf] %vm660, %v658
    %662 = vst.msk [vmem:[#allocation8 + $0x4] sm:$0xf] %vm660, %v649
    %v663 = vld [vmem:[#allocation2 + $0x200] sm:$0xff]
    %v664 = vld [vmem:[#allocation2 + $0x210] sm:$0xff]
    %v665 = vld [vmem:[#allocation2 + $0x220] sm:$0xff]
    %v666 = vld [vmem:[#allocation2 + $0x230] sm:$0xff]
    %v667 = vld [vmem:[#allocation2 + $0x240] sm:$0xff]
    %v668 = vld [vmem:[#allocation2 + $0x250] sm:$0xff]
    %v669 = vld [vmem:[#allocation2 + $0x260] sm:$0xff]
    %v670 = vld [vmem:[#allocation2 + $0x270] sm:$0xff]
    %v671 = vpack.c.bf16 %v655, %v655
    %v672 = vlaneseq
    %v673 = vshrl.u32 %v672, 7
    %v674 = vsub.s32 2, %v673
    %v675 = vrot.slane %v330, %v674
    %v676 = vlaneseq
    %v677 = vshrl.u32 %v676, 7
    %v678 = vsub.s32 2, %v677
    %v679 = vrot.slane %v331, %v678
    %v688 = vunpack.c.l.b16 %v663
    %v689 = vunpack.c.h.b16 %v663
    %v690 = vunpack.c.l.b16 %v664
    %v691 = vunpack.c.h.b16 %v664
    %v692 = vunpack.c.l.b16 %v665
    %v693 = vunpack.c.h.b16 %v665
    %v694 = vunpack.c.l.b16 %v666
    %v695 = vunpack.c.h.b16 %v666
    %v696 = vunpack.c.l.b16 %v667
    %v697 = vunpack.c.h.b16 %v667
    %v698 = vunpack.c.l.b16 %v668
    %v699 = vunpack.c.h.b16 %v668
    %v700 = vunpack.c.l.b16 %v669
    %v701 = vunpack.c.h.b16 %v669
    %v702 = vunpack.c.l.b16 %v670
    %v703 = vunpack.c.h.b16 %v670
    %v704 = vpack.c.b16 %v690, %v688
    %v705 = vpack.c.b16 %v691, %v689
    %v706 = vpack.c.b16 %v694, %v692
    %v707 = vpack.c.b16 %v695, %v693
    %v708 = vpack.c.b16 %v698, %v696
    %v709 = vpack.c.b16 %v699, %v697
    %v710 = vpack.c.b16 %v702, %v700
    %v711 = vpack.c.b16 %v703, %v701
    %v721 = vsel %vm570, %v671, 0
    %723 = vmatprep.subr.bf16.mxu0 0
    %724 = vmatpush1.bf16.msra.mxu0 0
    %725 = vmatprep.subr.bf16.mxu0 0
    %726 = vmatpush1.bf16.msra.mxu0 0
    %727 = vmatprep.subr.bf16.mxu0 0
    %728 = vmatpush1.bf16.msra.mxu0 0
    %729 = vmatprep.subr.bf16.mxu0 0
    %730 = vmatpush1.bf16.msra.mxu0 0
    %731 = vmatprep.subr.bf16.mxu0 %v711
    %732 = vmatpush1.bf16.msra.mxu0 %v710
    %733 = vmatprep.subr.bf16.mxu0 %v709
    %734 = vmatpush1.bf16.msra.mxu0 %v708
    %735 = vmatprep.subr.bf16.mxu0 %v707
    %736 = vmatpush1.bf16.msra.mxu0 %v706
    %737 = vmatprep.subr.bf16.mxu0 %v705
    %738 = vmatpush1.bf16.msra.mxu0 %v704
    %739 = vmatprep.subr.bf16.mxu0 0
    %740 = vmatpush2.bf16.msra.mxu0 0
    %741 = vmatprep.subr.bf16.mxu0 0
    %742 = vmatpush2.bf16.msra.mxu0 0
    %743 = vmatprep.subr.bf16.mxu0 0
    %744 = vmatpush2.bf16.msra.mxu0 0
    %745 = vmatprep.subr.bf16.mxu0 0
    %746 = vmatpush2.bf16.msra.mxu0 0
    %747 = vmatprep.subr.bf16.mxu0 0
    %748 = vmatpush2.bf16.msra.mxu0 0
    %749 = vmatprep.subr.bf16.mxu0 0
    %750 = vmatpush2.bf16.msra.mxu0 0
    %751 = vmatprep.subr.bf16.mxu0 0
    %752 = vmatpush2.bf16.msra.mxu0 0
    %753 = vmatprep.subr.bf16.mxu0 0
    %754 = vmatpush2.bf16.msra.mxu0 0
    %755 = vmatprep.mubr.bf16.mxu0 0
    %756 = vmatmul.mubr.bf16.gmra.mxu0 %v721
    %v757 = vpop.f32.mrf.mxu0
    %v758 = vadd.f32 %v675, %v757
    %v759 = vpop.f32.mrf.mxu0
    %v760 = vadd.f32 %v679, %v759
    %v761 = vpop.f32.mrf.mxu0
    %v762 = vpop.f32.mrf.mxu0
    %763 = vdwg.mxu0
    %v766 = vcombine.low %v758, %v760
    %768 = vst [vmem:[#allocation7] sm:$0xff] %v766
    // Predicated region
    $region22: #{rnn_forward.1} parent=1 // pred_check
      _
    $region23: #{rnn_forward.1} parent=1 // pred_check_branch
      %770 = sbr.rel (0) target = $region25
    $region24: #{rnn_forward.1} parent=1 // pred_region
      %s772 = ssub.s32 128, 128
      %773 = vsyncadd [#allocation4], %s772
      %s775 = sshll.u32 [#allocation7], 4
      %s776 = int_to_ptr.vmem [resolvable:$true] %s775
      %778 = dma.vmem_to_hbm [thread:$0]  %s776, 128, %s3, [#allocation4]
    $region25: #{rnn_forward.1} parent=1 // pred_fallthru
      _
    // Predicated region
    $region26: #{rnn_forward.1} parent=1 // pred_check
      _
    $region27: #{rnn_forward.1} parent=1 // pred_check_branch
      %780 = sbr.rel (0) target = $region29
    $region28: #{rnn_forward.1} parent=1 // pred_region
      %s782 = ssub.s32 128, 128
      %783 = vsyncadd [#allocation9], %s782
      %s785 = sshll.u32 [#allocation8], 4
      %s786 = int_to_ptr.vmem [resolvable:$true] %s785
      %788 = dma.vmem_to_hbm [thread:$0]  %s786, 128, %s4, [#allocation9]
    $region29: #{rnn_forward.1} parent=1 // pred_fallthru
      _
    // Predicated region
    $region30: #{rnn_forward.1} parent=1 // pred_check
      _
    $region31: #{rnn_forward.1} parent=1 // pred_check_branch
      %790 = sbr.rel (0) target = $region33
    $region32: #{rnn_forward.1} parent=1 // pred_region
      %791 = dma.done [#allocation4], 128
    $region33: #{rnn_forward.1} parent=1 // pred_fallthru
      _
    // Predicated region
    $region34: #{rnn_forward.1} parent=1 // pred_check
      _
    $region35: #{rnn_forward.1} parent=1 // pred_check_branch
      %793 = sbr.rel (0) target = $region37
    $region36: #{rnn_forward.1} parent=1 // pred_region
      %794 = dma.done [#allocation9], 128
    $region37: #{rnn_forward.1} parent=1 // pred_fallthru
      _
    %795 = vsyncpa [#allocation3], 1
    %796 = vsyncpa [#allocation6], 1
    %797 = vsyncpa [#allocation4], 1
    %798 = vsyncpa [#allocation9], 1

</llo_original>
